<compile_context>
chip_gen: v5e
topology: v5e:2x2
jax: 0.10.0
libtpu: 0.0.40
codegen_flags: <defaults>
</compile_context>

<pallas_src>
import math

import jax
import jax.numpy as jnp
from jax import lax
from jax.experimental import pallas as pl
from jax.experimental.pallas import tpu as pltpu

STATE_DIM = 2 + 10                 # flatten(state): 2 + |unique(deck)|
NUM_ACTIONS = 2
IN_DIM = STATE_DIM + NUM_ACTIONS   # 14
HIDDEN = (32, 32)
NUM_LAYERS = len(HIDDEN) + 1       # 3
PAD = 128                          # feature/hidden padding (one lane-width)
TILE_B = 256                       # batch rows per grid step (lane axis of activations)


def _mlp_kernel(xT_ref, w_ref, b_ref, o_ref):
    """Fused 3-layer MLP on feature-major activations (PAD, TILE_B); batch on lanes."""
    h = xT_ref[...]                                                        # (PAD, TILE_B)
    h = jnp.dot(w_ref[0], h, preferred_element_type=jnp.float32) + b_ref[0]
    h = jnp.maximum(h, 0.0)                                                # ReLU
    h = jnp.dot(w_ref[1], h, preferred_element_type=jnp.float32) + b_ref[1]
    h = jnp.maximum(h, 0.0)
    z = jnp.dot(w_ref[2], h, preferred_element_type=jnp.float32) + b_ref[2]
    # Row 0 carries the real output (padded weight rows are zero); lane-dense (1, TILE_B) store.
    o_ref[...] = 1.0 / (1.0 + jnp.exp(-z[0:1, :]))                         # Sigmoid


def mlp_forward_batched(x, w_slab, b_slab, *, tile_b=TILE_B):
    """x: (B, IN_DIM) f32 -> (B,) f32 Q-values in [0, 1]; one pallas_call for the whole batch."""
    B = x.shape[0]
    b_pad = tile_b * pl.cdiv(B, tile_b)
    # Feature-major, zero-padded input: batch sits on the lane axis inside the kernel.
    xT = jnp.zeros((PAD, b_pad), jnp.float32).at[:IN_DIM, :B].set(x.T)
    out = pl.pallas_call(
        _mlp_kernel,
        out_shape=jax.ShapeDtypeStruct((1, b_pad), jnp.float32),
        grid_spec=pltpu.PrefetchScalarGridSpec(
            num_scalar_prefetch=0,
            grid=(b_pad // tile_b,),
            in_specs=[
                pl.BlockSpec((PAD, tile_b), lambda i: (0, i)),               # streamed x tile
                pl.BlockSpec((NUM_LAYERS, PAD, PAD), lambda i: (0, 0, 0)),   # weights, resident
                pl.BlockSpec((NUM_LAYERS, PAD, 1), lambda i: (0, 0, 0)),     # biases, resident
            ],
            out_specs=pl.BlockSpec((1, tile_b), lambda i: (0, i)),
        ),
        compiler_params=pltpu.CompilerParams(
            dimension_semantics=("parallel",)),                               # v7x: 2 TCs split batch
    )(xT, w_slab, b_slab)
    return out[0, :B]


def init_params(key):
    """torch.nn.Linear-style init (U[-1/sqrt(fan_in), 1/sqrt(fan_in)]), packed into padded slabs.

    w_slab[l, :out, :in] = W_l (torch layout: out x in);  b_slab[l, :out, 0] = b_l.
    Padded rows/cols are zero so padded hidden units stay exactly 0 through ReLU layers.
    """
    dims = (IN_DIM,) + HIDDEN + (1,)
    w_slab = jnp.zeros((NUM_LAYERS, PAD, PAD), jnp.float32)
    b_slab = jnp.zeros((NUM_LAYERS, PAD, 1), jnp.float32)
    for l in range(NUM_LAYERS):
        fan_in, fan_out = dims[l], dims[l + 1]
        key, kw, kb = jax.random.split(key, 3)
        bound = 1.0 / math.sqrt(fan_in)
        w = jax.random.uniform(kw, (fan_out, fan_in), jnp.float32, -bound, bound)
        b = jax.random.uniform(kb, (fan_out,), jnp.float32, -bound, bound)
        w_slab = w_slab.at[l, :fan_out, :fan_in].set(w)
        b_slab = b_slab.at[l, :fan_out, 0].set(b)
    return (w_slab, b_slab)


def mlp_reference(x, w_slab, b_slab):
    """Pure-JAX (XLA) reference of the same padded math, for correctness checks."""
    B = x.shape[0]
    h = jnp.zeros((B, PAD), jnp.float32).at[:, :IN_DIM].set(x)
    for l in range(NUM_LAYERS):
        h = jnp.matmul(h, w_slab[l].T, precision=lax.Precision.HIGHEST) + b_slab[l][:, 0]
        if l < NUM_LAYERS - 1:
            h = jnp.maximum(h, 0.0)
    return 1.0 / (1.0 + jnp.exp(-h[:, 0]))


# ----------------------------- public, jitted, device-side API -----------------------------

@jax.jit
def rl_agent_forward_batch(params, states, action_indices):
    """Batched RLAgent.forward: states (N, STATE_DIM), action_indices (N,) -> Q (N,)."""
    w_slab, b_slab = params
    states = states.astype(jnp.float32).reshape(states.shape[0], -1)
    one_hot = jax.nn.one_hot(action_indices, NUM_ACTIONS, dtype=jnp.float32)
    x = jnp.concatenate([states, one_hot], axis=1)                          # (N, IN_DIM)
    return mlp_forward_batched(x, w_slab, b_slab)


@jax.jit
def rl_agent_forward(params, state, action_index):
    """Mirrors RLAgent.forward: single (state, action) -> 1-D vector of size 1."""
    a = jnp.asarray(action_index, jnp.int32).reshape(1)
    return rl_agent_forward_batch(params, state.reshape(1, -1), a)          # shape (1,)


@jax.jit
def rl_agent_get_argmax_action_index(params, states):
    """Batched get_argmax_action_index: both actions scored in one kernel call, argmax on device."""
    w_slab, b_slab = params
    N = states.shape[0]
    states = states.astype(jnp.float32).reshape(N, -1)
    eye = jnp.eye(NUM_ACTIONS, dtype=jnp.float32)
    x = jnp.concatenate(
        [jnp.repeat(states, NUM_ACTIONS, axis=0), jnp.tile(eye, (N, 1))], axis=1)  # (2N, IN_DIM)
    q = mlp_forward_batched(x, w_slab, b_slab).reshape(N, NUM_ACTIONS)
    return jnp.argmax(q, axis=1)                                            # (N,) int32, stays on device


if __name__ == "__main__":
    key = jax.random.PRNGKey(0)
    pkey, skey, akey = jax.random.split(key, 3)
    params = init_params(pkey)

    # Small deterministic "rollout" batch of states (player sum, dealer card, deck counts...).
    N = 500
    states = jax.random.uniform(skey, (N, STATE_DIM), jnp.float32)
    actions = jax.random.randint(akey, (N,), 0, NUM_ACTIONS)

    # Batched Q-values (one pallas_call for the whole batch).
    q = jax.block_until_ready(rl_agent_forward_batch(params, states, actions))
    assert q.shape == (N,)
    assert bool(jnp.all((q >= 0.0) & (q <= 1.0)))

    # Correctness vs pure-JAX reference.
    w_slab, b_slab = params
    x_ref = jnp.concatenate(
        [states, jax.nn.one_hot(actions, NUM_ACTIONS, dtype=jnp.float32)], axis=1)
    q_ref = mlp_reference(x_ref, w_slab, b_slab)
    assert bool(jnp.allclose(q, q_ref, atol=1e-4, rtol=1e-4))

    # Single (state, action) forward: 1-D vector of size 1, like the PyTorch module.
    q1 = jax.block_until_ready(rl_agent_forward(params, states[0], 1))
    assert q1.shape == (1,)
    assert bool(jnp.allclose(q1[0], q_ref_single := mlp_reference(
        jnp.concatenate([states[0], jnp.array([0.0, 1.0], jnp.float32)]).reshape(1, -1),
        w_slab, b_slab)[0], atol=1e-4, rtol=1e-4))

    # Batched device-side argmax (no host sync per decision).
    best = jax.block_until_ready(rl_agent_get_argmax_action_index(params, states))
    assert best.shape == (N,)
    assert bool(jnp.all((best == 0) | (best == 1)))

    print("KERNEL_OK")
</pallas_src>

<mosaic_0001>
module attributes {stable_mosaic.version = 11 : i64} {
  func.func @_mlp_kernel(%arg0: i32, %arg1: memref<128x256xf32, #tpu.memory_space<vmem>>, %arg2: memref<3x128x128xf32, #tpu.memory_space<vmem>>, %arg3: memref<3x128x1xf32, #tpu.memory_space<vmem>>, %arg4: memref<1x256xf32, #tpu.memory_space<vmem>>) attributes {dimension_semantics = [#tpu.dimension_semantics<parallel>], iteration_bounds = array<i64: 2>, scalar_prefetch = 0 : i64, scratch_operands = 0 : i64, tpu.core_type = #tpu.core_type<tc>, window_params = [{transform_indices = @transform_0, window_bounds = array<i64: 128, 256>}, {pipeline_mode = #tpu.pipeline_mode<synchronous>, transform_indices = @transform_1, window_bounds = array<i64: 3, 128, 128>}, {pipeline_mode = #tpu.pipeline_mode<synchronous>, transform_indices = @transform_2, window_bounds = array<i64: 3, 128, 1>}, {transform_indices = @transform_3, window_bounds = array<i64: 1, 256>}]} {
    %c0 = arith.constant 0 : index
    %c0_0 = arith.constant 0 : index
    %0 = vector.load %arg1[%c0, %c0_0] : memref<128x256xf32, #tpu.memory_space<vmem>>, vector<128x256xf32>
    %c0_1 = arith.constant 0 : index
    %c0_2 = arith.constant 0 : index
    %c0_3 = arith.constant 0 : index
    %1 = vector.load %arg2[%c0_1, %c0_2, %c0_3] : memref<3x128x128xf32, #tpu.memory_space<vmem>>, vector<1x128x128xf32>
    %2 = vector.shape_cast %1 : vector<1x128x128xf32> to vector<128x128xf32>
    %cst = arith.constant dense<0.000000e+00> : vector<128x256xf32>
    %3 = tpu.matmul %2, %0, %cst {dimension_numbers = #tpu.dot_dimension_numbers<[1], [0], [0], [1], [0, 0, 1, 1], [], []>} : vector<128x128xf32>, vector<128x256xf32>, vector<128x256xf32> -> vector<128x256xf32>
    %c0_4 = arith.constant 0 : index
    %c0_5 = arith.constant 0 : index
    %c0_6 = arith.constant 0 : index
    %4 = vector.load %arg3[%c0_4, %c0_5, %c0_6] : memref<3x128x1xf32, #tpu.memory_space<vmem>>, vector<1x128x1xf32>
    %5 = vector.shape_cast %4 : vector<1x128x1xf32> to vector<128x1xf32>
    %6 = vector.broadcast %5 : vector<128x1xf32> to vector<128x256xf32>
    %7 = arith.addf %3, %6 : vector<128x256xf32>
    %cst_7 = arith.constant 0.000000e+00 : f32
    %8 = vector.broadcast %cst_7 : f32 to vector<128x256xf32>
    %9 = arith.maximumf %7, %8 : vector<128x256xf32>
    %c1 = arith.constant 1 : index
    %c0_8 = arith.constant 0 : index
    %c0_9 = arith.constant 0 : index
    %10 = vector.load %arg2[%c1, %c0_8, %c0_9] : memref<3x128x128xf32, #tpu.memory_space<vmem>>, vector<1x128x128xf32>
    %11 = vector.shape_cast %10 : vector<1x128x128xf32> to vector<128x128xf32>
    %cst_10 = arith.constant dense<0.000000e+00> : vector<128x256xf32>
    %12 = tpu.matmul %11, %9, %cst_10 {dimension_numbers = #tpu.dot_dimension_numbers<[1], [0], [0], [1], [0, 0, 1, 1], [], []>} : vector<128x128xf32>, vector<128x256xf32>, vector<128x256xf32> -> vector<128x256xf32>
    %c1_11 = arith.constant 1 : index
    %c0_12 = arith.constant 0 : index
    %c0_13 = arith.constant 0 : index
    %13 = vector.load %arg3[%c1_11, %c0_12, %c0_13] : memref<3x128x1xf32, #tpu.memory_space<vmem>>, vector<1x128x1xf32>
    %14 = vector.shape_cast %13 : vector<1x128x1xf32> to vector<128x1xf32>
    %15 = vector.broadcast %14 : vector<128x1xf32> to vector<128x256xf32>
    %16 = arith.addf %12, %15 : vector<128x256xf32>
    %cst_14 = arith.constant 0.000000e+00 : f32
    %17 = vector.broadcast %cst_14 : f32 to vector<128x256xf32>
    %18 = arith.maximumf %16, %17 : vector<128x256xf32>
    %c2 = arith.constant 2 : index
    %c0_15 = arith.constant 0 : index
    %c0_16 = arith.constant 0 : index
    %19 = vector.load %arg2[%c2, %c0_15, %c0_16] : memref<3x128x128xf32, #tpu.memory_space<vmem>>, vector<1x128x128xf32>
    %20 = vector.shape_cast %19 : vector<1x128x128xf32> to vector<128x128xf32>
    %cst_17 = arith.constant dense<0.000000e+00> : vector<128x256xf32>
    %21 = tpu.matmul %20, %18, %cst_17 {dimension_numbers = #tpu.dot_dimension_numbers<[1], [0], [0], [1], [0, 0, 1, 1], [], []>} : vector<128x128xf32>, vector<128x256xf32>, vector<128x256xf32> -> vector<128x256xf32>
    %c2_18 = arith.constant 2 : index
    %c0_19 = arith.constant 0 : index
    %c0_20 = arith.constant 0 : index
    %22 = vector.load %arg3[%c2_18, %c0_19, %c0_20] : memref<3x128x1xf32, #tpu.memory_space<vmem>>, vector<1x128x1xf32>
    %23 = vector.shape_cast %22 : vector<1x128x1xf32> to vector<128x1xf32>
    %24 = vector.broadcast %23 : vector<128x1xf32> to vector<128x256xf32>
    %25 = arith.addf %21, %24 : vector<128x256xf32>
    %26 = vector.extract_strided_slice %25 {offsets = [0, 0], sizes = [1, 256], strides = [1, 1]} : vector<128x256xf32> to vector<1x256xf32>
    %cst_21 = arith.constant 0.000000e+00 : f32
    %27 = vector.broadcast %cst_21 : f32 to vector<1x256xf32>
    %28 = arith.subf %27, %26 : vector<1x256xf32>
    %29 = math.exp %28 : vector<1x256xf32>
    %cst_22 = arith.constant 1.000000e+00 : f32
    %30 = vector.broadcast %cst_22 : f32 to vector<1x256xf32>
    %31 = arith.addf %30, %29 : vector<1x256xf32>
    %cst_23 = arith.constant 1.000000e+00 : f32
    %32 = vector.broadcast %cst_23 : f32 to vector<1x256xf32>
    %33 = arith.divf %32, %31 : vector<1x256xf32>
    %c0_24 = arith.constant 0 : index
    %c0_25 = arith.constant 0 : index
    %34 = vector.load %arg4[%c0_24, %c0_25] : memref<1x256xf32, #tpu.memory_space<vmem>>, vector<1x256xf32>
    tpu.vector_store %arg4[%c0_24, %c0_25], %33 {strides = array<i32>} : memref<1x256xf32, #tpu.memory_space<vmem>>, vector<1x256xf32>,
    return
  }
  func.func @transform_0(%arg0: i32) -> (i32, i32) {
    %c0_i32 = arith.constant 0 : i32
    %c0_i32_0 = arith.constant 0 : i32
    return %c0_i32, %arg0 : i32, i32
  }
  func.func @transform_1(%arg0: i32) -> (i32, i32, i32) {
    %c0_i32 = arith.constant 0 : i32
    %c0_i32_0 = arith.constant 0 : i32
    %c0_i32_1 = arith.constant 0 : i32
    %c0_i32_2 = arith.constant 0 : i32
    return %c0_i32, %c0_i32_0, %c0_i32_1 : i32, i32, i32
  }
  func.func @transform_2(%arg0: i32) -> (i32, i32, i32) {
    %c0_i32 = arith.constant 0 : i32
    %c0_i32_0 = arith.constant 0 : i32
    %c0_i32_1 = arith.constant 0 : i32
    %c0_i32_2 = arith.constant 0 : i32
    return %c0_i32, %c0_i32_0, %c0_i32_1 : i32, i32, i32
  }
  func.func @transform_3(%arg0: i32) -> (i32, i32) {
    %c0_i32 = arith.constant 0 : i32
    %c0_i32_0 = arith.constant 0 : i32
    return %c0_i32, %arg0 : i32, i32
  }
}

</mosaic_0001>

<llo_original>
// kernel: rl_agent_forward_batch.1
$region0: #{rl_agent_forward_batch.1}
  #allocation0 [shape = 'u32[]', space=smem, size = 0x4, offset = 0x4, fixed_abs, tag = 'smem constant byte address 0x4 - core index']
  #allocation1 [shape = 'u32[72,128]{1,0:T(1,128)}', space=vmem, size = 0x9000, scoped, tag = 'internal scratch']
  %s0 = inlined_call_operand.vmem [shape: f32[128,512], index: 0, kind: input, shape index: {}]
  %s1 = inlined_call_operand.vmem [shape: f32[3,128,128], index: 1, kind: input, shape index: {}]
  %s2 = inlined_call_operand.vmem [shape: f32[3,128,1], index: 2, kind: input, shape index: {}]
  %s3 = inlined_call_operand.hbm [shape: f32[1,512], index: 3, kind: output, shape index: {}]
  %s4 = sld [smem:[#allocation0]]
  $region68: #{rl_agent_forward_batch.1} parent=0
    _
  %s6 = ssub.s32 1, %s4
  %s7 = scalar_select 0, %s6, %s4
  $region1: #{rl_agent_forward_batch.1} parent=0
    #allocation2 [shape = 'u8[262144]{0}', space=vmem, size = 0x40000, scoped, tag = 'input window, operand 0']
    #allocation3 [shape = 'u8[2048]{0}', space=vmem, size = 0x800, scoped, tag = 'output window, operand 0']
    #allocation4 [shape = 's32[2]{0}', space=sflag, size = 0x8, scoped, tag = 'scoped memory for rl_agent_forward_batch.1']
    %8 = vsyncpa [#allocation4], 0
    %s9 = scalar_lea.sflag [#allocation4], 1
    %10 = vsyncpa %s9, 0
    loop: start=0, step=1, limit=4
    $region2: #{rl_agent_forward_batch.1} parent=1 // loop_pre_header
      _
    $region3: #{rl_agent_forward_batch.1} parent=1 // loop_header
      %s12 = sphi 0, %s16
      %p13 = scmp.ge.s32.totalorder %s12, 4
      %s22 = sphi 0, %s24
      %s25 = sphi 0, %s22
      %s26 = sphi 0, %s25
      %s42 = sphi 0, %s26
      %s46 = sphi 0, %s46
      %s48 = sphi 0, %s46
      %s49 = sphi 0, %s48
      %s63 = sphi 0, %s49
      %s67 = sphi 0, %s67
      %s69 = sphi 0, %s67
      %s70 = sphi 0, %s69
      %s84 = sphi 0, %s70
      %s90 = sphi 0, %s92
      %s93 = sphi 0, %s90
      %s94 = sphi 0, %s93
      %s110 = sphi 0, %s94
    $region4: #{rl_agent_forward_batch.1} parent=1 // loop_header_branch
      %15 = sbr.rel (%p13) target = $region8
    $region5: #{rl_agent_forward_batch.1} parent=1 // loop_body
      %s17 = ssub.s32 %s12, 1
      %s18 = ssub.s32 %s12, 2
      %s19 = sadd.s32 %s12, 1
      %s20 = ssub.s32 %s12, %s19
      %p21 = scmp.eq.s32.totalorder %s20, 0
      %s23 = sadd.s32 %s22, 1
      %s24 = scalar_select %p21, %s22, %s23
      %p27 = pneg %p21
      %p28 = scmp.eq.s32.totalorder %s12, 1
      %p29 = por %p27, %p28
      %p30 = scmp.ne.s32.totalorder %s22, %s25
      %p31 = scmp.eq.s32.totalorder %s12, 0
      %p32 = por %p30, %p31
      %p33 = scmp.ne.s32.totalorder %s22, %s25
      %p34 = scmp.eq.s32.totalorder %s17, 1
      %p35 = por %p33, %p34
      %p36 = scmp.ne.s32.totalorder %s25, %s26
      %p37 = scmp.eq.s32.totalorder %s17, 0
      %p38 = por %p36, %p37
      %p39 = scmp.ne.s32.totalorder %s25, %s26
      %p40 = scmp.eq.s32.totalorder %s18, 1
      %p41 = por %p39, %p40
      %p43 = scmp.ne.s32.totalorder %s26, %s42
      %p44 = scmp.eq.s32.totalorder %s18, 0
      %p45 = por %p43, %p44
      %s47 = sadd.s32 %s46, 1
      %p50 = scmp.eq.s32.totalorder %s12, 1
      %p51 = scmp.ne.s32.totalorder %s46, %s48
      %p52 = scmp.eq.s32.totalorder %s12, 0
      %p53 = por %p51, %p52
      %p54 = scmp.ne.s32.totalorder %s46, %s48
      %p55 = scmp.eq.s32.totalorder %s17, 1
      %p56 = por %p54, %p55
      %p57 = scmp.ne.s32.totalorder %s48, %s49
      %p58 = scmp.eq.s32.totalorder %s17, 0
      %p59 = por %p57, %p58
      %p60 = scmp.ne.s32.totalorder %s48, %s49
      %p61 = scmp.eq.s32.totalorder %s18, 1
      %p62 = por %p60, %p61
      %p64 = scmp.ne.s32.totalorder %s49, %s63
      %p65 = scmp.eq.s32.totalorder %s18, 0
      %p66 = por %p64, %p65
      %s68 = sadd.s32 %s67, 1
      %p71 = scmp.eq.s32.totalorder %s12, 1
      %p72 = scmp.ne.s32.totalorder %s67, %s69
      %p73 = scmp.eq.s32.totalorder %s12, 0
      %p74 = por %p72, %p73
      %p75 = scmp.ne.s32.totalorder %s67, %s69
      %p76 = scmp.eq.s32.totalorder %s17, 1
      %p77 = por %p75, %p76
      %p78 = scmp.ne.s32.totalorder %s69, %s70
      %p79 = scmp.eq.s32.totalorder %s17, 0
      %p80 = por %p78, %p79
      %p81 = scmp.ne.s32.totalorder %s69, %s70
      %p82 = scmp.eq.s32.totalorder %s18, 1
      %p83 = por %p81, %p82
      %p85 = scmp.ne.s32.totalorder %s70, %s84
      %p86 = scmp.eq.s32.totalorder %s18, 0
      %p87 = por %p85, %p86
      %s88 = ssub.s32 %s12, %s19
      %p89 = scmp.eq.s32.totalorder %s88, 0
      %s91 = sadd.s32 %s90, 1
      %s92 = scalar_select %p89, %s90, %s91
      %p95 = pneg %p89
      %p96 = scmp.eq.s32.totalorder %s12, 1
      %p97 = por %p95, %p96
      %p98 = scmp.ne.s32.totalorder %s90, %s93
      %p99 = scmp.eq.s32.totalorder %s12, 0
      %p100 = por %p98, %p99
      %p101 = scmp.ne.s32.totalorder %s90, %s93
      %p102 = scmp.eq.s32.totalorder %s17, 1
      %p103 = por %p101, %p102
      %p104 = scmp.ne.s32.totalorder %s93, %s94
      %p105 = scmp.eq.s32.totalorder %s17, 0
      %p106 = por %p104, %p105
      %p107 = scmp.ne.s32.totalorder %s93, %s94
      %p108 = scmp.eq.s32.totalorder %s18, 1
      %p109 = por %p107, %p108
      %p111 = scmp.ne.s32.totalorder %s94, %s110
      %p112 = scmp.eq.s32.totalorder %s18, 0
      %p113 = por %p111, %p112
      %p114 = scmp.le.s32.totalorder 1, %s12
      %p115 = scmp.lt.s32.totalorder %s12, 3
      %p116 = pnand %p114, %p115
      %p117 = pneg %p116
      // Predicated region
      $region9: #{rl_agent_forward_batch.1} parent=5 // pred_check
        _
      $region10: #{rl_agent_forward_batch.1} parent=5 // pred_check_branch
        %119 = sbr.rel (%p116) target = $region12
      $region11: #{rl_agent_forward_batch.1} parent=5 // pred_region
        %s120 = ssub.s32 %s12, 1
        // Predicated region
        $region13: #{rl_agent_forward_batch.1} parent=11 // pred_check
          %p121 = pneg %p59
        $region14: #{rl_agent_forward_batch.1} parent=11 // pred_check_branch
          %123 = sbr.rel (%p121) target = $region16
        $region15: #{rl_agent_forward_batch.1} parent=11 // pred_region
          _
        $region16: #{rl_agent_forward_batch.1} parent=11 // pred_fallthru
          _
        // Predicated region
        $region17: #{rl_agent_forward_batch.1} parent=11 // pred_check
          %p124 = pneg %p80
        $region18: #{rl_agent_forward_batch.1} parent=11 // pred_check_branch
          %126 = sbr.rel (%p124) target = $region20
        $region19: #{rl_agent_forward_batch.1} parent=11 // pred_region
          _
        $region20: #{rl_agent_forward_batch.1} parent=11 // pred_fallthru
          _
      $region12: #{rl_agent_forward_batch.1} parent=5 // pred_fallthru
        _
      %p127 = scmp.lt.s32.totalorder %s12, 2
      // Predicated region
      $region21: #{rl_agent_forward_batch.1} parent=5 // pred_check
        %p128 = pneg %p127
      $region22: #{rl_agent_forward_batch.1} parent=5 // pred_check_branch
        %130 = sbr.rel (%p128) target = $region24
      $region23: #{rl_agent_forward_batch.1} parent=5 // pred_region
        // Predicated region
        $region25: #{rl_agent_forward_batch.1} parent=23 // pred_check
          %p131 = pneg %p32
        $region26: #{rl_agent_forward_batch.1} parent=23 // pred_check_branch
          %133 = sbr.rel (%p131) target = $region28
        $region27: #{rl_agent_forward_batch.1} parent=23 // pred_region
          %s134 = sand.u32 %s22, 1
          %s135 = sand.u32 %s22, 1
          %s136 = smul.addr %s135, 256
          %s137 = scalar_lea.vmem [#allocation2], %s136
          %s138 = smul.u32 2, %s12
          %s139 = smul.addr %s138, 8
          %s140 = scalar_lea.vmem %s0, %s139
          // Predicated region
          $region29: #{rl_agent_forward_batch.1} parent=27 // pred_check
            _
          $region30: #{rl_agent_forward_batch.1} parent=27 // pred_check_branch
            %142 = sbr.rel (0) target = $region32
          $region31: #{rl_agent_forward_batch.1} parent=27 // pred_region
            // Predicated region
            $region33: #{rl_agent_forward_batch.1} parent=31 // pred_check
              _
            $region34: #{rl_agent_forward_batch.1} parent=31 // pred_check_branch
              %144 = sbr.rel (0) target = $region36
            $region35: #{rl_agent_forward_batch.1} parent=31 // pred_region
              loop: start=0, step=1, limit=1
              $region37: #{rl_agent_forward_batch.1} parent=35 // loop_pre_header
                _
              $region38: #{rl_agent_forward_batch.1} parent=35 // loop_header
                %s146 = sphi 0, %s150
                %p147 = scmp.ge.s32.totalorder %s146, 1
                %s151 = sphi %s140, %s140
                %s152 = sphi %s137, %s137
              $region39: #{rl_agent_forward_batch.1} parent=35 // loop_header_branch
                %149 = sbr.rel (%p147) target = $region43
              $region40: #{rl_agent_forward_batch.1} parent=35 // loop_body
                %v153 = vld [vmem:[%s151] sm:$0xff]
                %154 = vst [vmem:[%s152] sm:$0xff] %v153
                %v155 = vld [vmem:[%s151 + $0x8] sm:$0xff]
                %156 = vst [vmem:[%s152 + $0x8] sm:$0xff] %v155
                %v157 = vld [vmem:[%s151 + $0x20] sm:$0xff]
                %158 = vst [vmem:[%s152 + $0x10] sm:$0xff] %v157
                %v159 = vld [vmem:[%s151 + $0x28] sm:$0xff]
                %160 = vst [vmem:[%s152 + $0x18] sm:$0xff] %v159
                %v161 = vld [vmem:[%s151 + $0x40] sm:$0xff]
                %162 = vst [vmem:[%s152 + $0x20] sm:$0xff] %v161
                %v163 = vld [vmem:[%s151 + $0x48] sm:$0xff]
                %164 = vst [vmem:[%s152 + $0x28] sm:$0xff] %v163
                %v165 = vld [vmem:[%s151 + $0x60] sm:$0xff]
                %166 = vst [vmem:[%s152 + $0x30] sm:$0xff] %v165
                %v167 = vld [vmem:[%s151 + $0x68] sm:$0xff]
                %168 = vst [vmem:[%s152 + $0x38] sm:$0xff] %v167
                %v169 = vld [vmem:[%s151 + $0x80] sm:$0xff]
                %170 = vst [vmem:[%s152 + $0x40] sm:$0xff] %v169
                %v171 = vld [vmem:[%s151 + $0x88] sm:$0xff]
                %172 = vst [vmem:[%s152 + $0x48] sm:$0xff] %v171
                %v173 = vld [vmem:[%s151 + $0xa0] sm:$0xff]
                %174 = vst [vmem:[%s152 + $0x50] sm:$0xff] %v173
                %v175 = vld [vmem:[%s151 + $0xa8] sm:$0xff]
                %176 = vst [vmem:[%s152 + $0x58] sm:$0xff] %v175
                %v177 = vld [vmem:[%s151 + $0xc0] sm:$0xff]
                %178 = vst [vmem:[%s152 + $0x60] sm:$0xff] %v177
                %v179 = vld [vmem:[%s151 + $0xc8] sm:$0xff]
                %180 = vst [vmem:[%s152 + $0x68] sm:$0xff] %v179
                %v181 = vld [vmem:[%s151 + $0xe0] sm:$0xff]
                %182 = vst [vmem:[%s152 + $0x70] sm:$0xff] %v181
                %v183 = vld [vmem:[%s151 + $0xe8] sm:$0xff]
                %184 = vst [vmem:[%s152 + $0x78] sm:$0xff] %v183
                %v185 = vld [vmem:[%s151 + $0x100] sm:$0xff]
                %186 = vst [vmem:[%s152 + $0x80] sm:$0xff] %v185
                %v187 = vld [vmem:[%s151 + $0x108] sm:$0xff]
                %188 = vst [vmem:[%s152 + $0x88] sm:$0xff] %v187
                %v189 = vld [vmem:[%s151 + $0x120] sm:$0xff]
                %190 = vst [vmem:[%s152 + $0x90] sm:$0xff] %v189
                %v191 = vld [vmem:[%s151 + $0x128] sm:$0xff]
                %192 = vst [vmem:[%s152 + $0x98] sm:$0xff] %v191
                %v193 = vld [vmem:[%s151 + $0x140] sm:$0xff]
                %194 = vst [vmem:[%s152 + $0xa0] sm:$0xff] %v193
                %v195 = vld [vmem:[%s151 + $0x148] sm:$0xff]
                %196 = vst [vmem:[%s152 + $0xa8] sm:$0xff] %v195
                %v197 = vld [vmem:[%s151 + $0x160] sm:$0xff]
                %198 = vst [vmem:[%s152 + $0xb0] sm:$0xff] %v197
                %v199 = vld [vmem:[%s151 + $0x168] sm:$0xff]
                %200 = vst [vmem:[%s152 + $0xb8] sm:$0xff] %v199
                %v201 = vld [vmem:[%s151 + $0x180] sm:$0xff]
                %202 = vst [vmem:[%s152 + $0xc0] sm:$0xff] %v201
                %v203 = vld [vmem:[%s151 + $0x188] sm:$0xff]
                %204 = vst [vmem:[%s152 + $0xc8] sm:$0xff] %v203
                %v205 = vld [vmem:[%s151 + $0x1a0] sm:$0xff]
                %206 = vst [vmem:[%s152 + $0xd0] sm:$0xff] %v205
                %v207 = vld [vmem:[%s151 + $0x1a8] sm:$0xff]
                %208 = vst [vmem:[%s152 + $0xd8] sm:$0xff] %v207
                %v209 = vld [vmem:[%s151 + $0x1c0] sm:$0xff]
                %210 = vst [vmem:[%s152 + $0xe0] sm:$0xff] %v209
                %v211 = vld [vmem:[%s151 + $0x1c8] sm:$0xff]
                %212 = vst [vmem:[%s152 + $0xe8] sm:$0xff] %v211
                %v213 = vld [vmem:[%s151 + $0x1e0] sm:$0xff]
                %214 = vst [vmem:[%s152 + $0xf0] sm:$0xff] %v213
                %v215 = vld [vmem:[%s151 + $0x1e8] sm:$0xff]
                %216 = vst [vmem:[%s152 + $0xf8] sm:$0xff] %v215
              $region41: #{rl_agent_forward_batch.1} parent=35 // loop_footer
                %s150 = sadd.s32 1, %s146
              $region42: #{rl_agent_forward_batch.1} parent=35 // loop_footer_branch
                %145 = sbr.rel target = $region38
              $region43: #{rl_agent_forward_batch.1} parent=35 // loop_exit
                _
            $region36: #{rl_agent_forward_batch.1} parent=31 // pred_fallthru
              _
            // Predicated region
            $region44: #{rl_agent_forward_batch.1} parent=31 // pred_check
              _
            $region45: #{rl_agent_forward_batch.1} parent=31 // pred_check_branch
              %218 = sbr.rel target = $region47
            $region46: #{rl_agent_forward_batch.1} parent=31 // pred_region
              _
            $region47: #{rl_agent_forward_batch.1} parent=31 // pred_fallthru
              _
          $region32: #{rl_agent_forward_batch.1} parent=27 // pred_fallthru
            _
          %219 = vnop
        $region28: #{rl_agent_forward_batch.1} parent=23 // pred_fallthru
          _
      $region24: #{rl_agent_forward_batch.1} parent=5 // pred_fallthru
        _
      %p220 = scmp.le.s32.totalorder 1, %s12
      %p221 = scmp.lt.s32.totalorder %s12, 3
      %p222 = pnand %p220, %p221
      %p223 = pneg %p222
      // Predicated region
      $region48: #{rl_agent_forward_batch.1} parent=5 // pred_check
        _
      $region49: #{rl_agent_forward_batch.1} parent=5 // pred_check_branch
        %225 = sbr.rel (%p222) target = $region51
      $region50: #{rl_agent_forward_batch.1} parent=5 // pred_region
        %s226 = ssub.s32 %s12, 1
        %s227 = sand.u32 %s25, 1
        %s228 = sand.u32 %s25, 1
        %s229 = smul.addr %s228, 256
        %s230 = scalar_lea.vmem [#allocation2], %s229
        // Predicated region
        $region52: #{rl_agent_forward_batch.1} parent=50 // pred_check
          %p231 = pneg %p38
        $region53: #{rl_agent_forward_batch.1} parent=50 // pred_check_branch
          %233 = sbr.rel (%p231) target = $region55
        $region54: #{rl_agent_forward_batch.1} parent=50 // pred_region
          _
        $region55: #{rl_agent_forward_batch.1} parent=50 // pred_fallthru
          _
        %s234 = sand.u32 %s25, 1
        %s235 = sand.u32 %s25, 1
        %s236 = smul.addr %s235, 256
        %s237 = scalar_lea.vmem [#allocation2], %s236
        %p238 = pneg %p38
        %p239 = pneg %p35
        %p240 = pneg %p59
        %p241 = pneg %p56
        %p242 = pneg %p80
        %p243 = pneg %p77
        %p244 = pneg %p106
        %p245 = pneg %p103
        %s246 = sand.u32 %s93, 1
        %s247 = scalar_lea.sflag [#allocation4], %s246
        %s248 = sand.u32 %s93, 1
        %s249 = smul.addr %s248, 2
        %s250 = scalar_lea.vmem [#allocation3], %s249
        %s251 = smul.u32 2, %s17
        %s252 = smul.u32 2, %s17
        %v253 = vld [vmem:[%s230] sm:$0xff]
        %v254 = vld [vmem:[%s230 + $0x8] sm:$0xff]
        %v255 = vld [vmem:[%s230 + $0x10] sm:$0xff]
        %v256 = vld [vmem:[%s230 + $0x18] sm:$0xff]
        %v257 = vld [vmem:[%s230 + $0x20] sm:$0xff]
        %v258 = vld [vmem:[%s230 + $0x28] sm:$0xff]
        %v259 = vld [vmem:[%s230 + $0x30] sm:$0xff]
        %v260 = vld [vmem:[%s230 + $0x38] sm:$0xff]
        %v261 = vld [vmem:[%s230 + $0x40] sm:$0xff]
        %v262 = vld [vmem:[%s230 + $0x48] sm:$0xff]
        %v263 = vld [vmem:[%s230 + $0x50] sm:$0xff]
        %v264 = vld [vmem:[%s230 + $0x58] sm:$0xff]
        %v265 = vld [vmem:[%s230 + $0x60] sm:$0xff]
        %v266 = vld [vmem:[%s230 + $0x68] sm:$0xff]
        %v267 = vld [vmem:[%s230 + $0x70] sm:$0xff]
        %v268 = vld [vmem:[%s230 + $0x78] sm:$0xff]
        %v269 = vld [vmem:[%s230 + $0x80] sm:$0xff]
        %v270 = vld [vmem:[%s230 + $0x88] sm:$0xff]
        %v271 = vld [vmem:[%s230 + $0x90] sm:$0xff]
        %v272 = vld [vmem:[%s230 + $0x98] sm:$0xff]
        %v273 = vld [vmem:[%s230 + $0xa0] sm:$0xff]
        %v274 = vld [vmem:[%s230 + $0xa8] sm:$0xff]
        %v275 = vld [vmem:[%s230 + $0xb0] sm:$0xff]
        %v276 = vld [vmem:[%s230 + $0xb8] sm:$0xff]
        %v277 = vld [vmem:[%s230 + $0xc0] sm:$0xff]
        %v278 = vld [vmem:[%s230 + $0xc8] sm:$0xff]
        %v279 = vld [vmem:[%s230 + $0xd0] sm:$0xff]
        %v280 = vld [vmem:[%s230 + $0xd8] sm:$0xff]
        %v281 = vld [vmem:[%s230 + $0xe0] sm:$0xff]
        %v282 = vld [vmem:[%s230 + $0xe8] sm:$0xff]
        %v283 = vld [vmem:[%s230 + $0xf0] sm:$0xff]
        %v284 = vld [vmem:[%s230 + $0xf8] sm:$0xff]
        %v285 = vld [vmem:[%s1] sm:$0xff]
        %v286 = vld [vmem:[%s1 + $0x8] sm:$0xff]
        %v287 = vld [vmem:[%s1 + $0x10] sm:$0xff]
        %v288 = vld [vmem:[%s1 + $0x18] sm:$0xff]
        %v289 = vld [vmem:[%s1 + $0x20] sm:$0xff]
        %v290 = vld [vmem:[%s1 + $0x28] sm:$0xff]
        %v291 = vld [vmem:[%s1 + $0x30] sm:$0xff]
        %v292 = vld [vmem:[%s1 + $0x38] sm:$0xff]
        %v293 = vld [vmem:[%s1 + $0x40] sm:$0xff]
        %v294 = vld [vmem:[%s1 + $0x48] sm:$0xff]
        %v295 = vld [vmem:[%s1 + $0x50] sm:$0xff]
        %v296 = vld [vmem:[%s1 + $0x58] sm:$0xff]
        %v297 = vld [vmem:[%s1 + $0x60] sm:$0xff]
        %v298 = vld [vmem:[%s1 + $0x68] sm:$0xff]
        %v299 = vld [vmem:[%s1 + $0x70] sm:$0xff]
        %v300 = vld [vmem:[%s1 + $0x78] sm:$0xff]
        %v301 = vld [vmem:[%s2] sm:$0xff]
        %v302 = vld [vmem:[%s2 + $0x8] sm:$0xff]
        %v303 = vld [vmem:[%s2 + $0x10] sm:$0xff]
        %v304 = vld [vmem:[%s2 + $0x18] sm:$0xff]
        %v305 = vld [vmem:[%s2 + $0x20] sm:$0xff]
        %v306 = vld [vmem:[%s2 + $0x28] sm:$0xff]
        %v307 = vld [vmem:[%s2 + $0x30] sm:$0xff]
        %v308 = vld [vmem:[%s2 + $0x38] sm:$0xff]
        %v309 = vld [vmem:[%s2 + $0x40] sm:$0xff]
        %v310 = vld [vmem:[%s2 + $0x48] sm:$0xff]
        %v311 = vld [vmem:[%s2 + $0x50] sm:$0xff]
        %v312 = vld [vmem:[%s2 + $0x58] sm:$0xff]
        %v313 = vld [vmem:[%s2 + $0x60] sm:$0xff]
        %v314 = vld [vmem:[%s2 + $0x68] sm:$0xff]
        %v315 = vld [vmem:[%s2 + $0x70] sm:$0xff]
        %v316 = vld [vmem:[%s2 + $0x78] sm:$0xff]
        %318 = vset.pattern.permute.xlu0 0
        %319 = vperm.xlu0 %318, %v301
        %v320 = vpop.permute.xlu0 %319
        %323 = vset.pattern.permute.xlu0 0
        %324 = vperm.xlu0 %323, %v302
        %v325 = vpop.permute.xlu0 %324
        %328 = vset.pattern.permute.xlu0 0
        %329 = vperm.xlu0 %328, %v303
        %v330 = vpop.permute.xlu0 %329
        %333 = vset.pattern.permute.xlu0 0
        %334 = vperm.xlu0 %333, %v304
        %v335 = vpop.permute.xlu0 %334
        %338 = vset.pattern.permute.xlu0 0
        %339 = vperm.xlu0 %338, %v305
        %v340 = vpop.permute.xlu0 %339
        %343 = vset.pattern.permute.xlu0 0
        %344 = vperm.xlu0 %343, %v306
        %v345 = vpop.permute.xlu0 %344
        %348 = vset.pattern.permute.xlu0 0
        %349 = vperm.xlu0 %348, %v307
        %v350 = vpop.permute.xlu0 %349
        %353 = vset.pattern.permute.xlu0 0
        %354 = vperm.xlu0 %353, %v308
        %v355 = vpop.permute.xlu0 %354
        %358 = vset.pattern.permute.xlu0 0
        %359 = vperm.xlu0 %358, %v309
        %v360 = vpop.permute.xlu0 %359
        %363 = vset.pattern.permute.xlu0 0
        %364 = vperm.xlu0 %363, %v310
        %v365 = vpop.permute.xlu0 %364
        %368 = vset.pattern.permute.xlu0 0
        %369 = vperm.xlu0 %368, %v311
        %v370 = vpop.permute.xlu0 %369
        %373 = vset.pattern.permute.xlu0 0
        %374 = vperm.xlu0 %373, %v312
        %v375 = vpop.permute.xlu0 %374
        %378 = vset.pattern.permute.xlu0 0
        %379 = vperm.xlu0 %378, %v313
        %v380 = vpop.permute.xlu0 %379
        %383 = vset.pattern.permute.xlu0 0
        %384 = vperm.xlu0 %383, %v314
        %v385 = vpop.permute.xlu0 %384
        %388 = vset.pattern.permute.xlu0 0
        %389 = vperm.xlu0 %388, %v315
        %v390 = vpop.permute.xlu0 %389
        %393 = vset.pattern.permute.xlu0 0
        %394 = vperm.xlu0 %393, %v316
        %v395 = vpop.permute.xlu0 %394
        %397 = vmatpush.msra.mxu0 %v283
        %398 = vmatpush.msra.mxu0 %v281
        %399 = vmatpush.msra.mxu0 %v279
        %400 = vmatpush.msra.mxu0 %v277
        %401 = vmatpush.msra.mxu0 %v275
        %402 = vmatpush.msra.mxu0 %v273
        %403 = vmatpush.msra.mxu0 %v271
        %404 = vmatpush.msra.mxu0 %v269
        %405 = vmatpush.msra.mxu0 %v267
        %406 = vmatpush.msra.mxu0 %v265
        %407 = vmatpush.msra.mxu0 %v263
        %408 = vmatpush.msra.mxu0 %v261
        %409 = vmatpush.msra.mxu0 %v259
        %410 = vmatpush.msra.mxu0 %v257
        %411 = vmatpush.msra.mxu0 %v255
        %412 = vmatpush.msra.mxu0 %v253
        %413 = vmatmul.f32.gmra.mxu0 %v285
        %v414 = vpop.f32.mrf.mxu0
        %v415 = vadd.f32 %v320, %v414
        %416 = vmatmul.f32.gmra.mxu0 %v286
        %v417 = vpop.f32.mrf.mxu0
        %v418 = vadd.f32 %v325, %v417
        %419 = vmatmul.f32.gmra.mxu0 %v287
        %v420 = vpop.f32.mrf.mxu0
        %v421 = vadd.f32 %v330, %v420
        %422 = vmatmul.f32.gmra.mxu0 %v288
        %v423 = vpop.f32.mrf.mxu0
        %v424 = vadd.f32 %v335, %v423
        %425 = vmatmul.f32.gmra.mxu0 %v289
        %v426 = vpop.f32.mrf.mxu0
        %v427 = vadd.f32 %v340, %v426
        %428 = vmatmul.f32.gmra.mxu0 %v290
        %v429 = vpop.f32.mrf.mxu0
        %v430 = vadd.f32 %v345, %v429
        %431 = vmatmul.f32.gmra.mxu0 %v291
        %v432 = vpop.f32.mrf.mxu0
        %v433 = vadd.f32 %v350, %v432
        %434 = vmatmul.f32.gmra.mxu0 %v292
        %v435 = vpop.f32.mrf.mxu0
        %v436 = vadd.f32 %v355, %v435
        %437 = vmatmul.f32.gmra.mxu0 %v293
        %v438 = vpop.f32.mrf.mxu0
        %v439 = vadd.f32 %v360, %v438
        %440 = vmatmul.f32.gmra.mxu0 %v294
        %v441 = vpop.f32.mrf.mxu0
        %v442 = vadd.f32 %v365, %v441
        %443 = vmatmul.f32.gmra.mxu0 %v295
        %v444 = vpop.f32.mrf.mxu0
        %v445 = vadd.f32 %v370, %v444
        %446 = vmatmul.f32.gmra.mxu0 %v296
        %v447 = vpop.f32.mrf.mxu0
        %v448 = vadd.f32 %v375, %v447
        %449 = vmatmul.f32.gmra.mxu0 %v297
        %v450 = vpop.f32.mrf.mxu0
        %v451 = vadd.f32 %v380, %v450
        %452 = vmatmul.f32.gmra.mxu0 %v298
        %v453 = vpop.f32.mrf.mxu0
        %v454 = vadd.f32 %v385, %v453
        %455 = vmatmul.f32.gmra.mxu0 %v299
        %v456 = vpop.f32.mrf.mxu0
        %v457 = vadd.f32 %v390, %v456
        %458 = vmatmul.f32.gmra.mxu0 %v300
        %v459 = vpop.f32.mrf.mxu0
        %v460 = vadd.f32 %v395, %v459
        %461 = vdwg.mxu0
        %462 = vmatpush.msra.mxu0 %v284
        %463 = vmatpush.msra.mxu0 %v282
        %464 = vmatpush.msra.mxu0 %v280
        %465 = vmatpush.msra.mxu0 %v278
        %466 = vmatpush.msra.mxu0 %v276
        %467 = vmatpush.msra.mxu0 %v274
        %468 = vmatpush.msra.mxu0 %v272
        %469 = vmatpush.msra.mxu0 %v270
        %470 = vmatpush.msra.mxu0 %v268
        %471 = vmatpush.msra.mxu0 %v266
        %472 = vmatpush.msra.mxu0 %v264
        %473 = vmatpush.msra.mxu0 %v262
        %474 = vmatpush.msra.mxu0 %v260
        %475 = vmatpush.msra.mxu0 %v258
        %476 = vmatpush.msra.mxu0 %v256
        %477 = vmatpush.msra.mxu0 %v254
        %478 = vmatmul.f32.gmra.mxu0 %v285
        %v479 = vpop.f32.mrf.mxu0
        %v480 = vadd.f32 %v320, %v479
        %481 = vmatmul.f32.gmra.mxu0 %v286
        %v482 = vpop.f32.mrf.mxu0
        %v483 = vadd.f32 %v325, %v482
        %484 = vmatmul.f32.gmra.mxu0 %v287
        %v485 = vpop.f32.mrf.mxu0
        %v486 = vadd.f32 %v330, %v485
        %487 = vmatmul.f32.gmra.mxu0 %v288
        %v488 = vpop.f32.mrf.mxu0
        %v489 = vadd.f32 %v335, %v488
        %490 = vmatmul.f32.gmra.mxu0 %v289
        %v491 = vpop.f32.mrf.mxu0
        %v492 = vadd.f32 %v340, %v491
        %493 = vmatmul.f32.gmra.mxu0 %v290
        %v494 = vpop.f32.mrf.mxu0
        %v495 = vadd.f32 %v345, %v494
        %496 = vmatmul.f32.gmra.mxu0 %v291
        %v497 = vpop.f32.mrf.mxu0
        %v498 = vadd.f32 %v350, %v497
        %499 = vmatmul.f32.gmra.mxu0 %v292
        %v500 = vpop.f32.mrf.mxu0
        %v501 = vadd.f32 %v355, %v500
        %502 = vmatmul.f32.gmra.mxu0 %v293
        %v503 = vpop.f32.mrf.mxu0
        %v504 = vadd.f32 %v360, %v503
        %505 = vmatmul.f32.gmra.mxu0 %v294
        %v506 = vpop.f32.mrf.mxu0
        %v507 = vadd.f32 %v365, %v506
        %508 = vmatmul.f32.gmra.mxu0 %v295
        %v509 = vpop.f32.mrf.mxu0
        %v510 = vadd.f32 %v370, %v509
        %511 = vmatmul.f32.gmra.mxu0 %v296
        %v512 = vpop.f32.mrf.mxu0
        %v513 = vadd.f32 %v375, %v512
        %514 = vmatmul.f32.gmra.mxu0 %v297
        %v515 = vpop.f32.mrf.mxu0
        %v516 = vadd.f32 %v380, %v515
        %517 = vmatmul.f32.gmra.mxu0 %v298
        %v518 = vpop.f32.mrf.mxu0
        %v519 = vadd.f32 %v385, %v518
        %520 = vmatmul.f32.gmra.mxu0 %v299
        %v521 = vpop.f32.mrf.mxu0
        %v522 = vadd.f32 %v390, %v521
        %523 = vmatmul.f32.gmra.mxu0 %v300
        %v524 = vpop.f32.mrf.mxu0
        %v525 = vadd.f32 %v395, %v524
        %526 = vdwg.mxu0
        %v527 = vmax.f32 %v415, 0.0
        %v528 = vmax.f32 %v480, 0.0
        %v529 = vmax.f32 %v418, 0.0
        %v530 = vmax.f32 %v483, 0.0
        %v531 = vmax.f32 %v421, 0.0
        %v532 = vmax.f32 %v486, 0.0
        %v533 = vmax.f32 %v424, 0.0
        %v534 = vmax.f32 %v489, 0.0
        %v535 = vmax.f32 %v427, 0.0
        %v536 = vmax.f32 %v492, 0.0
        %v537 = vmax.f32 %v430, 0.0
        %v538 = vmax.f32 %v495, 0.0
        %v539 = vmax.f32 %v433, 0.0
        %v540 = vmax.f32 %v498, 0.0
        %v541 = vmax.f32 %v436, 0.0
        %v542 = vmax.f32 %v501, 0.0
        %v543 = vmax.f32 %v439, 0.0
        %v544 = vmax.f32 %v504, 0.0
        %v545 = vmax.f32 %v442, 0.0
        %v546 = vmax.f32 %v507, 0.0
        %v547 = vmax.f32 %v445, 0.0
        %v548 = vmax.f32 %v510, 0.0
        %v549 = vmax.f32 %v448, 0.0
        %v550 = vmax.f32 %v513, 0.0
        %v551 = vmax.f32 %v451, 0.0
        %v552 = vmax.f32 %v516, 0.0
        %v553 = vmax.f32 %v454, 0.0
        %v554 = vmax.f32 %v519, 0.0
        %v555 = vmax.f32 %v457, 0.0
        %v556 = vmax.f32 %v522, 0.0
        %v557 = vmax.f32 %v460, 0.0
        %v558 = vmax.f32 %v525, 0.0
        %s559 = scalar_lea.vmem %s1, 128
        %v560 = vld [vmem:[%s559] sm:$0xff]
        %v561 = vld [vmem:[%s559 + $0x8] sm:$0xff]
        %v562 = vld [vmem:[%s559 + $0x10] sm:$0xff]
        %v563 = vld [vmem:[%s559 + $0x18] sm:$0xff]
        %v564 = vld [vmem:[%s559 + $0x20] sm:$0xff]
        %v565 = vld [vmem:[%s559 + $0x28] sm:$0xff]
        %v566 = vld [vmem:[%s559 + $0x30] sm:$0xff]
        %v567 = vld [vmem:[%s559 + $0x38] sm:$0xff]
        %v568 = vld [vmem:[%s559 + $0x40] sm:$0xff]
        %v569 = vld [vmem:[%s559 + $0x48] sm:$0xff]
        %v570 = vld [vmem:[%s559 + $0x50] sm:$0xff]
        %v571 = vld [vmem:[%s559 + $0x58] sm:$0xff]
        %v572 = vld [vmem:[%s559 + $0x60] sm:$0xff]
        %v573 = vld [vmem:[%s559 + $0x68] sm:$0xff]
        %v574 = vld [vmem:[%s559 + $0x70] sm:$0xff]
        %v575 = vld [vmem:[%s559 + $0x78] sm:$0xff]
        %s576 = scalar_lea.vmem %s2, 128
        %v577 = vld [vmem:[%s576] sm:$0xff]
        %v578 = vld [vmem:[%s576 + $0x8] sm:$0xff]
        %v579 = vld [vmem:[%s576 + $0x10] sm:$0xff]
        %v580 = vld [vmem:[%s576 + $0x18] sm:$0xff]
        %v581 = vld [vmem:[%s576 + $0x20] sm:$0xff]
        %v582 = vld [vmem:[%s576 + $0x28] sm:$0xff]
        %v583 = vld [vmem:[%s576 + $0x30] sm:$0xff]
        %v584 = vld [vmem:[%s576 + $0x38] sm:$0xff]
        %v585 = vld [vmem:[%s576 + $0x40] sm:$0xff]
        %v586 = vld [vmem:[%s576 + $0x48] sm:$0xff]
        %v587 = vld [vmem:[%s576 + $0x50] sm:$0xff]
        %v588 = vld [vmem:[%s576 + $0x58] sm:$0xff]
        %v589 = vld [vmem:[%s576 + $0x60] sm:$0xff]
        %v590 = vld [vmem:[%s576 + $0x68] sm:$0xff]
        %v591 = vld [vmem:[%s576 + $0x70] sm:$0xff]
        %v592 = vld [vmem:[%s576 + $0x78] sm:$0xff]
        %594 = vset.pattern.permute.xlu0 0
        %595 = vperm.xlu0 %594, %v577
        %v596 = vpop.permute.xlu0 %595
        %599 = vset.pattern.permute.xlu0 0
        %600 = vperm.xlu0 %599, %v578
        %v601 = vpop.permute.xlu0 %600
        %604 = vset.pattern.permute.xlu0 0
        %605 = vperm.xlu0 %604, %v579
        %v606 = vpop.permute.xlu0 %605
        %609 = vset.pattern.permute.xlu0 0
        %610 = vperm.xlu0 %609, %v580
        %v611 = vpop.permute.xlu0 %610
        %614 = vset.pattern.permute.xlu0 0
        %615 = vperm.xlu0 %614, %v581
        %v616 = vpop.permute.xlu0 %615
        %619 = vset.pattern.permute.xlu0 0
        %620 = vperm.xlu0 %619, %v582
        %v621 = vpop.permute.xlu0 %620
        %624 = vset.pattern.permute.xlu0 0
        %625 = vperm.xlu0 %624, %v583
        %v626 = vpop.permute.xlu0 %625
        %629 = vset.pattern.permute.xlu0 0
        %630 = vperm.xlu0 %629, %v584
        %v631 = vpop.permute.xlu0 %630
        %634 = vset.pattern.permute.xlu0 0
        %635 = vperm.xlu0 %634, %v585
        %v636 = vpop.permute.xlu0 %635
        %639 = vset.pattern.permute.xlu0 0
        %640 = vperm.xlu0 %639, %v586
        %v641 = vpop.permute.xlu0 %640
        %644 = vset.pattern.permute.xlu0 0
        %645 = vperm.xlu0 %644, %v587
        %v646 = vpop.permute.xlu0 %645
        %649 = vset.pattern.permute.xlu0 0
        %650 = vperm.xlu0 %649, %v588
        %v651 = vpop.permute.xlu0 %650
        %654 = vset.pattern.permute.xlu0 0
        %655 = vperm.xlu0 %654, %v589
        %v656 = vpop.permute.xlu0 %655
        %659 = vset.pattern.permute.xlu0 0
        %660 = vperm.xlu0 %659, %v590
        %v661 = vpop.permute.xlu0 %660
        %664 = vset.pattern.permute.xlu0 0
        %665 = vperm.xlu0 %664, %v591
        %v666 = vpop.permute.xlu0 %665
        %669 = vset.pattern.permute.xlu0 0
        %670 = vperm.xlu0 %669, %v592
        %v671 = vpop.permute.xlu0 %670
        %673 = vmatpush.msra.mxu0 %v557
        %674 = vmatpush.msra.mxu0 %v555
        %675 = vmatpush.msra.mxu0 %v553
        %676 = vmatpush.msra.mxu0 %v551
        %677 = vmatpush.msra.mxu0 %v549
        %678 = vmatpush.msra.mxu0 %v547
        %679 = vmatpush.msra.mxu0 %v545
        %680 = vmatpush.msra.mxu0 %v543
        %681 = vmatpush.msra.mxu0 %v541
        %682 = vmatpush.msra.mxu0 %v539
        %683 = vmatpush.msra.mxu0 %v537
        %684 = vmatpush.msra.mxu0 %v535
        %685 = vmatpush.msra.mxu0 %v533
        %686 = vmatpush.msra.mxu0 %v531
        %687 = vmatpush.msra.mxu0 %v529
        %688 = vmatpush.msra.mxu0 %v527
        %689 = vmatmul.f32.gmra.mxu0 %v560
        %v690 = vpop.f32.mrf.mxu0
        %v691 = vadd.f32 %v596, %v690
        %692 = vmatmul.f32.gmra.mxu0 %v561
        %v693 = vpop.f32.mrf.mxu0
        %v694 = vadd.f32 %v601, %v693
        %695 = vmatmul.f32.gmra.mxu0 %v562
        %v696 = vpop.f32.mrf.mxu0
        %v697 = vadd.f32 %v606, %v696
        %698 = vmatmul.f32.gmra.mxu0 %v563
        %v699 = vpop.f32.mrf.mxu0
        %v700 = vadd.f32 %v611, %v699
        %701 = vmatmul.f32.gmra.mxu0 %v564
        %v702 = vpop.f32.mrf.mxu0
        %v703 = vadd.f32 %v616, %v702
        %704 = vmatmul.f32.gmra.mxu0 %v565
        %v705 = vpop.f32.mrf.mxu0
        %v706 = vadd.f32 %v621, %v705
        %707 = vmatmul.f32.gmra.mxu0 %v566
        %v708 = vpop.f32.mrf.mxu0
        %v709 = vadd.f32 %v626, %v708
        %710 = vmatmul.f32.gmra.mxu0 %v567
        %v711 = vpop.f32.mrf.mxu0
        %v712 = vadd.f32 %v631, %v711
        %713 = vmatmul.f32.gmra.mxu0 %v568
        %v714 = vpop.f32.mrf.mxu0
        %v715 = vadd.f32 %v636, %v714
        %716 = vmatmul.f32.gmra.mxu0 %v569
        %v717 = vpop.f32.mrf.mxu0
        %v718 = vadd.f32 %v641, %v717
        %719 = vmatmul.f32.gmra.mxu0 %v570
        %v720 = vpop.f32.mrf.mxu0
        %v721 = vadd.f32 %v646, %v720
        %722 = vmatmul.f32.gmra.mxu0 %v571
        %v723 = vpop.f32.mrf.mxu0
        %v724 = vadd.f32 %v651, %v723
        %725 = vmatmul.f32.gmra.mxu0 %v572
        %v726 = vpop.f32.mrf.mxu0
        %v727 = vadd.f32 %v656, %v726
        %728 = vmatmul.f32.gmra.mxu0 %v573
        %v729 = vpop.f32.mrf.mxu0
        %v730 = vadd.f32 %v661, %v729
        %731 = vmatmul.f32.gmra.mxu0 %v574
        %v732 = vpop.f32.mrf.mxu0
        %v733 = vadd.f32 %v666, %v732
        %734 = vmatmul.f32.gmra.mxu0 %v575
        %v735 = vpop.f32.mrf.mxu0
        %v736 = vadd.f32 %v671, %v735
        %737 = vdwg.mxu0
        %738 = vmatpush.msra.mxu0 %v558
        %739 = vmatpush.msra.mxu0 %v556
        %740 = vmatpush.msra.mxu0 %v554
        %741 = vmatpush.msra.mxu0 %v552
        %742 = vmatpush.msra.mxu0 %v550
        %743 = vmatpush.msra.mxu0 %v548
        %744 = vmatpush.msra.mxu0 %v546
        %745 = vmatpush.msra.mxu0 %v544
        %746 = vmatpush.msra.mxu0 %v542
        %747 = vmatpush.msra.mxu0 %v540
        %748 = vmatpush.msra.mxu0 %v538
        %749 = vmatpush.msra.mxu0 %v536
        %750 = vmatpush.msra.mxu0 %v534
        %751 = vmatpush.msra.mxu0 %v532
        %752 = vmatpush.msra.mxu0 %v530
        %753 = vmatpush.msra.mxu0 %v528
        %754 = vmatmul.f32.gmra.mxu0 %v560
        %v755 = vpop.f32.mrf.mxu0
        %v756 = vadd.f32 %v596, %v755
        %757 = vmatmul.f32.gmra.mxu0 %v561
        %v758 = vpop.f32.mrf.mxu0
        %v759 = vadd.f32 %v601, %v758
        %760 = vmatmul.f32.gmra.mxu0 %v562
        %v761 = vpop.f32.mrf.mxu0
        %v762 = vadd.f32 %v606, %v761
        %763 = vmatmul.f32.gmra.mxu0 %v563
        %v764 = vpop.f32.mrf.mxu0
        %v765 = vadd.f32 %v611, %v764
        %766 = vmatmul.f32.gmra.mxu0 %v564
        %v767 = vpop.f32.mrf.mxu0
        %v768 = vadd.f32 %v616, %v767
        %769 = vmatmul.f32.gmra.mxu0 %v565
        %v770 = vpop.f32.mrf.mxu0
        %v771 = vadd.f32 %v621, %v770
        %772 = vmatmul.f32.gmra.mxu0 %v566
        %v773 = vpop.f32.mrf.mxu0
        %v774 = vadd.f32 %v626, %v773
        %775 = vmatmul.f32.gmra.mxu0 %v567
        %v776 = vpop.f32.mrf.mxu0
        %v777 = vadd.f32 %v631, %v776
        %778 = vmatmul.f32.gmra.mxu0 %v568
        %v779 = vpop.f32.mrf.mxu0
        %v780 = vadd.f32 %v636, %v779
        %781 = vmatmul.f32.gmra.mxu0 %v569
        %v782 = vpop.f32.mrf.mxu0
        %v783 = vadd.f32 %v641, %v782
        %784 = vmatmul.f32.gmra.mxu0 %v570
        %v785 = vpop.f32.mrf.mxu0
        %v786 = vadd.f32 %v646, %v785
        %787 = vmatmul.f32.gmra.mxu0 %v571
        %v788 = vpop.f32.mrf.mxu0
        %v789 = vadd.f32 %v651, %v788
        %790 = vmatmul.f32.gmra.mxu0 %v572
        %v791 = vpop.f32.mrf.mxu0
        %v792 = vadd.f32 %v656, %v791
        %793 = vmatmul.f32.gmra.mxu0 %v573
        %v794 = vpop.f32.mrf.mxu0
        %v795 = vadd.f32 %v661, %v794
        %796 = vmatmul.f32.gmra.mxu0 %v574
        %v797 = vpop.f32.mrf.mxu0
        %v798 = vadd.f32 %v666, %v797
        %799 = vmatmul.f32.gmra.mxu0 %v575
        %v800 = vpop.f32.mrf.mxu0
        %v801 = vadd.f32 %v671, %v800
        %802 = vdwg.mxu0
        %v803 = vmax.f32 %v691, 0.0
        %v804 = vmax.f32 %v756, 0.0
        %v805 = vmax.f32 %v694, 0.0
        %v806 = vmax.f32 %v759, 0.0
        %v807 = vmax.f32 %v697, 0.0
        %v808 = vmax.f32 %v762, 0.0
        %v809 = vmax.f32 %v700, 0.0
        %v810 = vmax.f32 %v765, 0.0
        %v811 = vmax.f32 %v703, 0.0
        %v812 = vmax.f32 %v768, 0.0
        %v813 = vmax.f32 %v706, 0.0
        %v814 = vmax.f32 %v771, 0.0
        %v815 = vmax.f32 %v709, 0.0
        %v816 = vmax.f32 %v774, 0.0
        %v817 = vmax.f32 %v712, 0.0
        %v818 = vmax.f32 %v777, 0.0
        %v819 = vmax.f32 %v715, 0.0
        %v820 = vmax.f32 %v780, 0.0
        %v821 = vmax.f32 %v718, 0.0
        %v822 = vmax.f32 %v783, 0.0
        %v823 = vmax.f32 %v721, 0.0
        %v824 = vmax.f32 %v786, 0.0
        %v825 = vmax.f32 %v724, 0.0
        %v826 = vmax.f32 %v789, 0.0
        %v827 = vmax.f32 %v727, 0.0
        %v828 = vmax.f32 %v792, 0.0
        %v829 = vmax.f32 %v730, 0.0
        %v830 = vmax.f32 %v795, 0.0
        %v831 = vmax.f32 %v733, 0.0
        %v832 = vmax.f32 %v798, 0.0
        %v833 = vmax.f32 %v736, 0.0
        %v834 = vmax.f32 %v801, 0.0
        %s835 = scalar_lea.vmem %s1, 256
        %v836 = vld [vmem:[%s835] sm:$0xff]
        %v837 = vld [vmem:[%s835 + $0x8] sm:$0xff]
        %v838 = vld [vmem:[%s835 + $0x10] sm:$0xff]
        %v839 = vld [vmem:[%s835 + $0x18] sm:$0xff]
        %v840 = vld [vmem:[%s835 + $0x20] sm:$0xff]
        %v841 = vld [vmem:[%s835 + $0x28] sm:$0xff]
        %v842 = vld [vmem:[%s835 + $0x30] sm:$0xff]
        %v843 = vld [vmem:[%s835 + $0x38] sm:$0xff]
        %v844 = vld [vmem:[%s835 + $0x40] sm:$0xff]
        %v845 = vld [vmem:[%s835 + $0x48] sm:$0xff]
        %v846 = vld [vmem:[%s835 + $0x50] sm:$0xff]
        %v847 = vld [vmem:[%s835 + $0x58] sm:$0xff]
        %v848 = vld [vmem:[%s835 + $0x60] sm:$0xff]
        %v849 = vld [vmem:[%s835 + $0x68] sm:$0xff]
        %v850 = vld [vmem:[%s835 + $0x70] sm:$0xff]
        %v851 = vld [vmem:[%s835 + $0x78] sm:$0xff]
        %s852 = scalar_lea.vmem %s2, 256
        %v853 = vld [vmem:[%s852] sm:$0xff]
        %v854 = vld [vmem:[%s852 + $0x8] sm:$0xff]
        %v855 = vld [vmem:[%s852 + $0x10] sm:$0xff]
        %v856 = vld [vmem:[%s852 + $0x18] sm:$0xff]
        %v857 = vld [vmem:[%s852 + $0x20] sm:$0xff]
        %v858 = vld [vmem:[%s852 + $0x28] sm:$0xff]
        %v859 = vld [vmem:[%s852 + $0x30] sm:$0xff]
        %v860 = vld [vmem:[%s852 + $0x38] sm:$0xff]
        %v861 = vld [vmem:[%s852 + $0x40] sm:$0xff]
        %v862 = vld [vmem:[%s852 + $0x48] sm:$0xff]
        %v863 = vld [vmem:[%s852 + $0x50] sm:$0xff]
        %v864 = vld [vmem:[%s852 + $0x58] sm:$0xff]
        %v865 = vld [vmem:[%s852 + $0x60] sm:$0xff]
        %v866 = vld [vmem:[%s852 + $0x68] sm:$0xff]
        %v867 = vld [vmem:[%s852 + $0x70] sm:$0xff]
        %v868 = vld [vmem:[%s852 + $0x78] sm:$0xff]
        %870 = vset.pattern.permute.xlu0 0
        %871 = vperm.xlu0 %870, %v853
        %v872 = vpop.permute.xlu0 %871
        %875 = vset.pattern.permute.xlu0 0
        %876 = vperm.xlu0 %875, %v854
        %v877 = vpop.permute.xlu0 %876
        %879 = vset.pattern.permute.xlu0 0
        %880 = vperm.xlu0 %879, %v855
        %v881 = vpop.permute.xlu0 %880
        %883 = vset.pattern.permute.xlu0 0
        %884 = vperm.xlu0 %883, %v856
        %v885 = vpop.permute.xlu0 %884
        %887 = vset.pattern.permute.xlu0 0
        %888 = vperm.xlu0 %887, %v857
        %v889 = vpop.permute.xlu0 %888
        %891 = vset.pattern.permute.xlu0 0
        %892 = vperm.xlu0 %891, %v858
        %v893 = vpop.permute.xlu0 %892
        %895 = vset.pattern.permute.xlu0 0
        %896 = vperm.xlu0 %895, %v859
        %v897 = vpop.permute.xlu0 %896
        %899 = vset.pattern.permute.xlu0 0
        %900 = vperm.xlu0 %899, %v860
        %v901 = vpop.permute.xlu0 %900
        %903 = vset.pattern.permute.xlu0 0
        %904 = vperm.xlu0 %903, %v861
        %v905 = vpop.permute.xlu0 %904
        %907 = vset.pattern.permute.xlu0 0
        %908 = vperm.xlu0 %907, %v862
        %v909 = vpop.permute.xlu0 %908
        %911 = vset.pattern.permute.xlu0 0
        %912 = vperm.xlu0 %911, %v863
        %v913 = vpop.permute.xlu0 %912
        %915 = vset.pattern.permute.xlu0 0
        %916 = vperm.xlu0 %915, %v864
        %v917 = vpop.permute.xlu0 %916
        %919 = vset.pattern.permute.xlu0 0
        %920 = vperm.xlu0 %919, %v865
        %v921 = vpop.permute.xlu0 %920
        %923 = vset.pattern.permute.xlu0 0
        %924 = vperm.xlu0 %923, %v866
        %v925 = vpop.permute.xlu0 %924
        %927 = vset.pattern.permute.xlu0 0
        %928 = vperm.xlu0 %927, %v867
        %v929 = vpop.permute.xlu0 %928
        %931 = vset.pattern.permute.xlu0 0
        %932 = vperm.xlu0 %931, %v868
        %v933 = vpop.permute.xlu0 %932
        %934 = vmatpush.msra.mxu0 %v833
        %935 = vmatpush.msra.mxu0 %v831
        %936 = vmatpush.msra.mxu0 %v829
        %937 = vmatpush.msra.mxu0 %v827
        %938 = vmatpush.msra.mxu0 %v825
        %939 = vmatpush.msra.mxu0 %v823
        %940 = vmatpush.msra.mxu0 %v821
        %941 = vmatpush.msra.mxu0 %v819
        %942 = vmatpush.msra.mxu0 %v817
        %943 = vmatpush.msra.mxu0 %v815
        %944 = vmatpush.msra.mxu0 %v813
        %945 = vmatpush.msra.mxu0 %v811
        %946 = vmatpush.msra.mxu0 %v809
        %947 = vmatpush.msra.mxu0 %v807
        %948 = vmatpush.msra.mxu0 %v805
        %949 = vmatpush.msra.mxu0 %v803
        %950 = vmatmul.f32.gmra.mxu0 %v836
        %v951 = vpop.f32.mrf.mxu0
        %v952 = vadd.f32 %v872, %v951
        %953 = vmatmul.f32.gmra.mxu0 %v837
        %v954 = vpop.f32.mrf.mxu0
        %955 = vmatmul.f32.gmra.mxu0 %v838
        %v956 = vpop.f32.mrf.mxu0
        %957 = vmatmul.f32.gmra.mxu0 %v839
        %v958 = vpop.f32.mrf.mxu0
        %959 = vmatmul.f32.gmra.mxu0 %v840
        %v960 = vpop.f32.mrf.mxu0
        %961 = vmatmul.f32.gmra.mxu0 %v841
        %v962 = vpop.f32.mrf.mxu0
        %963 = vmatmul.f32.gmra.mxu0 %v842
        %v964 = vpop.f32.mrf.mxu0
        %965 = vmatmul.f32.gmra.mxu0 %v843
        %v966 = vpop.f32.mrf.mxu0
        %967 = vmatmul.f32.gmra.mxu0 %v844
        %v968 = vpop.f32.mrf.mxu0
        %969 = vmatmul.f32.gmra.mxu0 %v845
        %v970 = vpop.f32.mrf.mxu0
        %971 = vmatmul.f32.gmra.mxu0 %v846
        %v972 = vpop.f32.mrf.mxu0
        %973 = vmatmul.f32.gmra.mxu0 %v847
        %v974 = vpop.f32.mrf.mxu0
        %975 = vmatmul.f32.gmra.mxu0 %v848
        %v976 = vpop.f32.mrf.mxu0
        %977 = vmatmul.f32.gmra.mxu0 %v849
        %v978 = vpop.f32.mrf.mxu0
        %979 = vmatmul.f32.gmra.mxu0 %v850
        %v980 = vpop.f32.mrf.mxu0
        %981 = vmatmul.f32.gmra.mxu0 %v851
        %v982 = vpop.f32.mrf.mxu0
        %983 = vdwg.mxu0
        %984 = vmatpush.msra.mxu0 %v834
        %985 = vmatpush.msra.mxu0 %v832
        %986 = vmatpush.msra.mxu0 %v830
        %987 = vmatpush.msra.mxu0 %v828
        %988 = vmatpush.msra.mxu0 %v826
        %989 = vmatpush.msra.mxu0 %v824
        %990 = vmatpush.msra.mxu0 %v822
        %991 = vmatpush.msra.mxu0 %v820
        %992 = vmatpush.msra.mxu0 %v818
        %993 = vmatpush.msra.mxu0 %v816
        %994 = vmatpush.msra.mxu0 %v814
        %995 = vmatpush.msra.mxu0 %v812
        %996 = vmatpush.msra.mxu0 %v810
        %997 = vmatpush.msra.mxu0 %v808
        %998 = vmatpush.msra.mxu0 %v806
        %999 = vmatpush.msra.mxu0 %v804
        %1000 = vmatmul.f32.gmra.mxu0 %v836
        %v1001 = vpop.f32.mrf.mxu0
        %v1002 = vadd.f32 %v872, %v1001
        %1003 = vmatmul.f32.gmra.mxu0 %v837
        %v1004 = vpop.f32.mrf.mxu0
        %1005 = vmatmul.f32.gmra.mxu0 %v838
        %v1006 = vpop.f32.mrf.mxu0
        %1007 = vmatmul.f32.gmra.mxu0 %v839
        %v1008 = vpop.f32.mrf.mxu0
        %1009 = vmatmul.f32.gmra.mxu0 %v840
        %v1010 = vpop.f32.mrf.mxu0
        %1011 = vmatmul.f32.gmra.mxu0 %v841
        %v1012 = vpop.f32.mrf.mxu0
        %1013 = vmatmul.f32.gmra.mxu0 %v842
        %v1014 = vpop.f32.mrf.mxu0
        %1015 = vmatmul.f32.gmra.mxu0 %v843
        %v1016 = vpop.f32.mrf.mxu0
        %1017 = vmatmul.f32.gmra.mxu0 %v844
        %v1018 = vpop.f32.mrf.mxu0
        %1019 = vmatmul.f32.gmra.mxu0 %v845
        %v1020 = vpop.f32.mrf.mxu0
        %1021 = vmatmul.f32.gmra.mxu0 %v846
        %v1022 = vpop.f32.mrf.mxu0
        %1023 = vmatmul.f32.gmra.mxu0 %v847
        %v1024 = vpop.f32.mrf.mxu0
        %1025 = vmatmul.f32.gmra.mxu0 %v848
        %v1026 = vpop.f32.mrf.mxu0
        %1027 = vmatmul.f32.gmra.mxu0 %v849
        %v1028 = vpop.f32.mrf.mxu0
        %1029 = vmatmul.f32.gmra.mxu0 %v850
        %v1030 = vpop.f32.mrf.mxu0
        %1031 = vmatmul.f32.gmra.mxu0 %v851
        %v1032 = vpop.f32.mrf.mxu0
        %1033 = vdwg.mxu0
        %v1034 = vsub.f32 0.0, %v952
        %v1035 = vsub.f32 0.0, %v1002
        %v1036 = vmul.f32 %v1034, 1.442695
        %v1037 = vpow.pop %v1036
        %v1038 = vmul.f32 %v1035, 1.442695
        %v1039 = vpow.pop %v1038
        %v1040 = vadd.f32 %v1037, 1.0
        %v1041 = vadd.f32 %v1039, 1.0
        %v1042 = vrcp.pop %v1040
        %v1043 = vmul.f32 %v1040, %v1042
        %v1044 = vsub.f32 1.0, %v1043
        %v1045 = vmul.f32 %v1042, %v1044
        %v1046 = vadd.f32 %v1042, %v1045
        %vm1047 = vweird.f32 %v1040
        %vm1048 = vweird.f32 %v1042
        %vm1049 = vmor %vm1047, %vm1048
        %v1050 = vsel %vm1049, %v1042, %v1046
        %v1051 = vand.u32 2147483647, %v1040
        %vm1052 = vcmp.eq.f32.partialorder %v1051, 8.507059e+37
        %v1053 = vand.u32 %v1040, 2147483648
        %v1054 = vor.u32 1.1754944e-38, %v1053
        %v1055 = vsel %vm1052, %v1054, %v1050
        %v1056 = vmul.f32 1.0, %v1055
        %v1057 = vrcp.pop %v1041
        %v1058 = vmul.f32 %v1041, %v1057
        %v1059 = vsub.f32 1.0, %v1058
        %v1060 = vmul.f32 %v1057, %v1059
        %v1061 = vadd.f32 %v1057, %v1060
        %vm1062 = vweird.f32 %v1041
        %vm1063 = vweird.f32 %v1057
        %vm1064 = vmor %vm1062, %vm1063
        %v1065 = vsel %vm1064, %v1057, %v1061
        %v1066 = vand.u32 2147483647, %v1041
        %vm1067 = vcmp.eq.f32.partialorder %v1066, 8.507059e+37
        %v1068 = vand.u32 %v1041, 2147483648
        %v1069 = vor.u32 1.1754944e-38, %v1068
        %v1070 = vsel %vm1067, %v1069, %v1065
        %v1071 = vmul.f32 1.0, %v1070
        %v1074 = vrot.slane %v1071, 7
        %vm1075 = vcmask 1040384
        %v1076 = vsel %vm1075, %v1056, %v1074
        %v1078 = vlaneseq
        %vm1079 = vcmp.ge.s32.totalorder %v1078, 0
        %vm1080 = vcmp.lt.s32.totalorder %v1078, 256
        %vm1081 = vmand %vm1079, %vm1080
        %1082 = vst.msk [vmem:[%s250] sm:$0x3] %vm1081, %v1076
        %s1083 = sand.u32 %s93, 1
        %s1084 = scalar_lea.sflag [#allocation4], %s1083
        %s1085 = sand.u32 %s93, 1
        %s1086 = smul.addr %s1085, 2
        %s1087 = scalar_lea.vmem [#allocation3], %s1086
        // Predicated region
        $region56: #{rl_agent_forward_batch.1} parent=50 // pred_check
          %p1088 = pneg %p103
        $region57: #{rl_agent_forward_batch.1} parent=50 // pred_check_branch
          %1090 = sbr.rel (%p1088) target = $region59
        $region58: #{rl_agent_forward_batch.1} parent=50 // pred_region
          %s1091 = smul.u32 2, %s17
          %1093 = vsyncadd %s1084, 0
          %s1094 = scalar_lea.hbm %s3, %s1091
          %s1096 = sshll.u32 %s1087, 4
          %s1097 = int_to_ptr.vmem [resolvable:$true] %s1096
          %s1098 = sshll.u32 %s1094, 4
          %s1099 = int_to_ptr.hbm [resolvable:$true] %s1098
          %1101 = dma.vmem_to_hbm [thread:$0]  %s1097, 32, %s1099, %s1084
        $region59: #{rl_agent_forward_batch.1} parent=50 // pred_fallthru
          _
      $region51: #{rl_agent_forward_batch.1} parent=5 // pred_fallthru
        _
      %p1102 = scmp.le.s32.totalorder 2, %s12
      // Predicated region
      $region60: #{rl_agent_forward_batch.1} parent=5 // pred_check
        %p1103 = pneg %p1102
      $region61: #{rl_agent_forward_batch.1} parent=5 // pred_check_branch
        %1105 = sbr.rel (%p1103) target = $region63
      $region62: #{rl_agent_forward_batch.1} parent=5 // pred_region
        %s1106 = ssub.s32 %s12, 2
        // Predicated region
        $region64: #{rl_agent_forward_batch.1} parent=62 // pred_check
          %p1107 = pneg %p109
        $region65: #{rl_agent_forward_batch.1} parent=62 // pred_check_branch
          %1109 = sbr.rel (%p1107) target = $region67
        $region66: #{rl_agent_forward_batch.1} parent=62 // pred_region
          %s1110 = sand.u32 %s94, 1
          %s1111 = scalar_lea.sflag [#allocation4], %s1110
          %s1112 = sand.u32 %s94, 1
          %s1113 = smul.addr %s1112, 2
          %s1114 = scalar_lea.vmem [#allocation3], %s1113
          %1116 = dma.done %s1111, 32
        $region67: #{rl_agent_forward_batch.1} parent=62 // pred_fallthru
          _
      $region63: #{rl_agent_forward_batch.1} parent=5 // pred_fallthru
        _
    $region6: #{rl_agent_forward_batch.1} parent=1 // loop_footer
      %s16 = sadd.s32 1, %s12
    $region7: #{rl_agent_forward_batch.1} parent=1 // loop_footer_branch
      %11 = sbr.rel target = $region3
    $region8: #{rl_agent_forward_batch.1} parent=1 // loop_exit
      _
    %1117 = vsyncpa [#allocation4], 1
    %s1118 = scalar_lea.sflag [#allocation4], 1
    %1119 = vsyncpa %s1118, 1

</llo_original>
